<compile_context>
chip_gen: v5e
topology: v5e:2x2
jax: 0.10.0
libtpu: 0.0.40
codegen_flags: <defaults>
</compile_context>

<pallas_src>
import functools

import numpy as np
import jax
import jax.numpy as jnp
from jax.experimental import pallas as pl
from jax.experimental.pallas import tpu as pltpu


# --------------------------------------------------------------------------
# Deterministic parameter construction (mirrors librosa.filters.mel, slaney)
# --------------------------------------------------------------------------
def _hz_to_mel(f):
    f = np.asarray(f, dtype=np.float64)
    f_sp = 200.0 / 3.0
    mels = f / f_sp
    min_log_hz = 1000.0
    min_log_mel = min_log_hz / f_sp
    logstep = np.log(6.4) / 27.0
    return np.where(f >= min_log_hz,
                    min_log_mel + np.log(np.maximum(f, 1e-10) / min_log_hz) / logstep,
                    mels)


def _mel_to_hz(m):
    m = np.asarray(m, dtype=np.float64)
    f_sp = 200.0 / 3.0
    freqs = f_sp * m
    min_log_hz = 1000.0
    min_log_mel = min_log_hz / f_sp
    logstep = np.log(6.4) / 27.0
    return np.where(m >= min_log_mel,
                    min_log_hz * np.exp(logstep * (m - min_log_mel)),
                    freqs)


def librosa_mel_fn(sr, n_fft, n_mels, fmin, fmax):
    n_freq = n_fft // 2 + 1
    fftfreqs = np.linspace(0.0, sr / 2.0, n_freq)
    mels = np.linspace(_hz_to_mel(fmin), _hz_to_mel(fmax), n_mels + 2)
    mel_f = _mel_to_hz(mels)
    fdiff = np.diff(mel_f)
    ramps = mel_f[:, None] - fftfreqs[None, :]
    lower = -ramps[:-2] / fdiff[:-1, None]
    upper = ramps[2:] / fdiff[1:, None]
    weights = np.maximum(0.0, np.minimum(lower, upper))
    enorm = 2.0 / (mel_f[2:n_mels + 2] - mel_f[:n_mels])
    weights *= enorm[:, None]
    return weights.astype(np.float32)          # (n_mels, n_fft//2 + 1)


def hann_window(win_length):
    # torch.hann_window default (periodic=True)
    n = np.arange(win_length, dtype=np.float64)
    return 0.5 - 0.5 * np.cos(2.0 * np.pi * n / win_length)


def _round_up(x, m):
    return ((x + m - 1) // m) * m


def _cdiv(a, b):
    return -(-a // b)


def _pick_tiling(n_frames, batches, max_tile):
    """Pick (frame_tile, frame_tiles_per_batch) minimising padded rows while
    keeping >= 4 total grid steps (>= 2 per TensorCore on v7x megacore)."""
    grid_f = max(1, _cdiv(n_frames, max_tile))
    while batches * grid_f < 4 and grid_f < _cdiv(n_frames, 8):
        grid_f += 1
    tm = _round_up(_cdiv(n_frames, grid_f), 8)
    grid_f = _cdiv(n_frames, tm)
    return tm, grid_f


# --------------------------------------------------------------------------
# Pallas kernel
#   per grid step (b, i):
#     DMA a contiguous slab of (tm + r - 1) hop-rows of padded audio -> VMEM,
#     windowed one-sided DFT as r K-blocked bf16 matmuls (window folded into
#     dftT), magnitude, mel matmul, log10(clamp(., 1e-5)).
# --------------------------------------------------------------------------
def _audio2mel_kernel(audio_ref, dftT_ref, melT_ref, out_ref, slab_ref, sem,
                      *, tm, hop, r, nfp, rows_per_batch, slab_rows):
    b = pl.program_id(0)
    i = pl.program_id(1)
    row0 = b * rows_per_batch + i * tm          # first hop-row of this tile

    cp = pltpu.make_async_copy(audio_ref.at[pl.ds(row0, slab_rows), :],
                               slab_ref, sem)
    cp.start()
    cp.wait()                                   # DMA << matmul time per step

    # frames[f] = concat(slab[f], slab[f+1], ..., slab[f+r-1])  (n_fft = r*hop)
    # => frames @ dftT = sum_j slab[j:j+tm] @ dftT[j*hop:(j+1)*hop]
    y = None
    for j in range(r):
        lhs = slab_ref[j:j + tm, :].astype(jnp.bfloat16)          # (tm, hop)
        part = jnp.dot(lhs, dftT_ref[j * hop:(j + 1) * hop, :],
                       preferred_element_type=jnp.float32)        # (tm, 2*nfp)
        y = part if y is None else y + part

    re = y[:, :nfp]
    im = y[:, nfp:]
    mag = jnp.sqrt(re * re + im * im)                             # (tm, nfp)
    mel = jnp.dot(mag.astype(jnp.bfloat16), melT_ref[...],
                  preferred_element_type=jnp.float32)             # (tm, nmelp)
    out_ref[0, :, :] = jnp.log10(jnp.maximum(mel, 1e-5))


class Audio2MelPallas:
    def __init__(self, n_fft=1024, hop_length=256, win_length=1024,
                 sampling_rate=16000, n_mel_channels=80,
                 mel_fmin=80.0, mel_fmax=7600.0, row_tile=512):
        assert win_length == n_fft, "this kernel assumes win_length == n_fft"
        assert n_fft % hop_length == 0, "in-kernel framing needs n_fft % hop == 0"
        # TODO(synk): support n_fft % hop != 0 by falling back to wrapper-side framing.
        assert row_tile % 8 == 0 and row_tile >= 8
        self.n_fft = n_fft
        self.hop_length = hop_length
        self.win_length = win_length
        self.n_mel_channels = n_mel_channels
        self.row_tile = row_tile
        self.r = n_fft // hop_length

        n_freq = n_fft // 2 + 1
        mel_basis = librosa_mel_fn(sampling_rate, n_fft, n_mel_channels,
                                   mel_fmin, mel_fmax)            # (n_mel, n_freq)
        self.mel_basis_full = mel_basis

        # Frequency truncation: drop trailing FFT bins whose mel weight is 0.
        nz = np.nonzero(np.any(mel_basis != 0.0, axis=0))[0]
        n_used = (int(nz[-1]) + 1) if nz.size else n_freq
        nfp = max(128, _round_up(n_used, 128))    # padded (lane-aligned) freq axis
        n_keep = min(nfp, n_freq)                 # real bins kept
        assert np.all(mel_basis[:, n_keep:] == 0.0), \
            "frequency truncation requires all dropped bins to have zero mel weight"
        nmelp = max(128, _round_up(n_mel_channels, 128))  # lane-dense output

        # One-sided DFT (real | imag), Hann window folded in:  (f*w)@C == f@(diag(w)C)
        n = np.arange(n_fft, dtype=np.float64)[:, None]
        k = np.arange(n_keep, dtype=np.float64)[None, :]
        ang = 2.0 * np.pi * n * k / n_fft
        win = hann_window(win_length)[:, None]                     # (n_fft, 1)
        dft = np.zeros((n_fft, 2 * nfp), np.float64)
        dft[:, :n_keep] = np.cos(ang) * win
        dft[:, nfp:nfp + n_keep] = -np.sin(ang) * win

        melT = np.zeros((nfp, nmelp), np.float32)
        melT[:n_keep, :n_mel_channels] = mel_basis[:, :n_keep].T

        # bf16 operands (f32 accumulation in the kernel) for full-rate MXU.
        self.dftT = jnp.asarray(dft, dtype=jnp.bfloat16)           # (n_fft, 2*nfp)
        self.melT = jnp.asarray(melT, dtype=jnp.bfloat16)          # (nfp, nmelp)
        self.nfp = nfp
        self.nmelp = nmelp

    # ------------------------------------------------------------------
    def __call__(self, audio):
        B, C, T = audio.shape
        assert C == 1
        p = (self.n_fft - self.hop_length) // 2
        # 'constant' (zero) padding, exactly as in the PyTorch module spec.
        x = jnp.pad(audio[:, 0, :], ((0, 0), (p, p)))              # (B, T + 2p)
        t_pad = T + 2 * p
        n_frames = 1 + (t_pad - self.n_fft) // self.hop_length
        hop, r = self.hop_length, self.r

        tm, grid_f = _pick_tiling(n_frames, B, self.row_tile)
        f_pad = grid_f * tm
        R = f_pad + r - 1              # hop-rows per batch so the last slab is in-bounds
        need = R * hop
        if need > t_pad:
            x = jnp.pad(x, ((0, 0), (0, need - t_pad)))
        elif need < t_pad:
            x = x[:, :need]            # trailing samples not covered by any frame
        audio_hops = x.reshape(B * R, hop)                          # (B*R, hop) f32
        slab_rows = tm + r - 1

        kernel = functools.partial(
            _audio2mel_kernel, tm=tm, hop=hop, r=r, nfp=self.nfp,
            rows_per_batch=R, slab_rows=slab_rows)

        total = B * f_pad
        flops = (2 * total * self.n_fft * (2 * self.nfp)
                 + 2 * total * self.nfp * self.nmelp)
        transcendentals = total * (self.nfp + self.nmelp)           # sqrt + log10
        bytes_accessed = (audio_hops.size * 4 + total * self.nmelp * 4
                          + self.dftT.size * 2 + self.melT.size * 2)

        out = pl.pallas_call(
            kernel,
            out_shape=jax.ShapeDtypeStruct((B, f_pad, self.nmelp), jnp.float32),
            grid_spec=pltpu.PrefetchScalarGridSpec(
                num_scalar_prefetch=0,
                grid=(B, grid_f),
                in_specs=[
                    pl.BlockSpec(memory_space=pl.ANY),              # raw HBM audio
                    pl.BlockSpec((self.n_fft, 2 * self.nfp), lambda b, i: (0, 0)),
                    pl.BlockSpec((self.nfp, self.nmelp), lambda b, i: (0, 0)),
                ],
                out_specs=pl.BlockSpec((1, tm, self.nmelp), lambda b, i: (b, i, 0)),
                scratch_shapes=[
                    pltpu.VMEM((slab_rows, hop), jnp.float32),      # audio slab
                    pltpu.SemaphoreType.DMA,
                ],
            ),
            compiler_params=pltpu.CompilerParams(
                dimension_semantics=("parallel", "parallel"),
                vmem_limit_bytes=32 * 1024 * 1024),
            cost_estimate=pl.CostEstimate(flops=flops,
                                          transcendentals=transcendentals,
                                          bytes_accessed=bytes_accessed),
        )(audio_hops, self.dftT, self.melT)

        out = out[:, :n_frames, :self.n_mel_channels]               # drop padded rows
        return jnp.transpose(out, (0, 2, 1))                        # (B, n_mel, F)

    # ------------------------------------------------------------------
    # Plain-JAX reference with the SAME arithmetic as the kernel
    # (bf16 operands, f32 accumulation) -- structural correctness check.
    def reference_matched(self, audio):
        B, _, T = audio.shape
        p = (self.n_fft - self.hop_length) // 2
        x = jnp.pad(audio[:, 0, :], ((0, 0), (p, p)))
        n_frames = 1 + (x.shape[1] - self.n_fft) // self.hop_length
        idx = (np.arange(n_frames)[:, None] * self.hop_length
               + np.arange(self.n_fft)[None, :])
        frames = x[:, idx].astype(jnp.bfloat16)                     # (B, F, n_fft)
        y = jnp.einsum("bfn,nk->bfk", frames, self.dftT,
                       preferred_element_type=jnp.float32)
        re = y[..., :self.nfp]
        im = y[..., self.nfp:]
        mag = jnp.sqrt(re * re + im * im)
        mel = jnp.einsum("bfk,km->bfm", mag.astype(jnp.bfloat16), self.melT,
                         preferred_element_type=jnp.float32)[..., :self.n_mel_channels]
        return jnp.transpose(jnp.log10(jnp.maximum(mel, 1e-5)), (0, 2, 1))

    # Independent full-precision f32 reference of the PyTorch module's math
    # (no truncation, no bf16) -- precision sanity check.
    def reference(self, audio):
        B, _, T = audio.shape
        p = (self.n_fft - self.hop_length) // 2
        x = jnp.pad(audio[:, 0, :], ((0, 0), (p, p)))
        n_frames = 1 + (x.shape[1] - self.n_fft) // self.hop_length
        idx = (np.arange(n_frames)[:, None] * self.hop_length
               + np.arange(self.n_fft)[None, :])
        frames = x[:, idx]                                          # (B, F, n_fft)
        n_freq = self.n_fft // 2 + 1
        n = np.arange(self.n_fft, dtype=np.float64)[:, None]
        k = np.arange(n_freq, dtype=np.float64)[None, :]
        ang = 2.0 * np.pi * n * k / self.n_fft
        win = hann_window(self.win_length)[:, None]
        cos_m = jnp.asarray((np.cos(ang) * win).astype(np.float32))
        sin_m = jnp.asarray((-np.sin(ang) * win).astype(np.float32))
        hi = jax.lax.Precision.HIGHEST
        re = jnp.einsum("bfn,nk->bfk", frames, cos_m, precision=hi)
        im = jnp.einsum("bfn,nk->bfk", frames, sin_m, precision=hi)
        mag = jnp.sqrt(re * re + im * im)
        mel = jnp.einsum("mk,bfk->bmf", jnp.asarray(self.mel_basis_full), mag,
                         precision=hi)
        return jnp.log10(jnp.maximum(mel, 1e-5))


if __name__ == "__main__":
    # Small, module-consistent config: n_fft=256, hop=64, 80 mel bins.
    B, T = 2, 1024
    key = jax.random.PRNGKey(0)
    audio = jax.random.normal(key, (B, 1, T), dtype=jnp.float32) * 0.1

    model = Audio2MelPallas(n_fft=256, hop_length=64, win_length=256,
                            sampling_rate=16000, n_mel_channels=80,
                            mel_fmin=80.0, mel_fmax=7600.0)

    log_mel = model(audio)
    jax.block_until_ready(log_mel)
    assert log_mel.shape == (B, 80, 16), log_mel.shape

    # Structural check: identical arithmetic (bf16 ops, f32 accum) in plain JAX.
    ref_bf16 = model.reference_matched(audio)
    max_d = float(jnp.max(jnp.abs(log_mel - ref_bf16)))
    assert jnp.allclose(log_mel, ref_bf16, atol=1e-2, rtol=0.0), max_d

    # Precision sanity check vs. the independent full-f32 reference.
    ref_f32 = model.reference(audio)
    mean_d = float(jnp.mean(jnp.abs(log_mel - ref_f32)))
    assert mean_d < 2e-2, mean_d

    print("KERNEL_OK")
</pallas_src>

<mosaic_0001>
module attributes {stable_mosaic.version = 11 : i64} {
  func.func @_audio2mel_kernel(%arg0: i32, %arg1: i32, %arg2: memref<38x64xf32, #tpu.memory_space<any>>, %arg3: memref<256x256xbf16, #tpu.memory_space<vmem>>, %arg4: memref<128x128xbf16, #tpu.memory_space<vmem>>, %arg5: memref<1x8x128xf32, #tpu.memory_space<vmem>>, %arg6: memref<11x64xf32, #tpu.memory_space<vmem>>, %arg7: memref<!tpu.dma_semaphore, #tpu.memory_space<semaphore_mem>>) attributes {dimension_semantics = [#tpu.dimension_semantics<parallel>, #tpu.dimension_semantics<parallel>], iteration_bounds = array<i64: 2, 2>, scalar_prefetch = 0 : i64, scratch_operands = 2 : i64, tpu.core_type = #tpu.core_type<tc>, window_params = [{}, {pipeline_mode = #tpu.pipeline_mode<synchronous>, transform_indices = @transform_1, window_bounds = array<i64: 256, 256>}, {pipeline_mode = #tpu.pipeline_mode<synchronous>, transform_indices = @transform_2, window_bounds = array<i64: 128, 128>}, {transform_indices = @transform_3, window_bounds = array<i64: 1, 8, 128>}]} {
    %c19_i32 = arith.constant 19 : i32
    %0 = arith.muli %arg0, %c19_i32 : i32
    %c8_i32 = arith.constant 8 : i32
    %1 = arith.muli %arg1, %c8_i32 : i32
    %2 = arith.addi %0, %1 : i32
    %c0_i32 = arith.constant 0 : i32
    %3 = tpu.memref_slice %arg2[%2, %c0_i32] : memref<38x64xf32, #tpu.memory_space<any>> -> memref<11x64xf32, #tpu.memory_space<any>>
    tpu.enqueue_dma source(%3 : memref<11x64xf32, #tpu.memory_space<any>>) target(%arg6 : memref<11x64xf32, #tpu.memory_space<vmem>>) target_semaphore(%arg7 : memref<!tpu.dma_semaphore, #tpu.memory_space<semaphore_mem>>)
    %c0_i32_0 = arith.constant 0 : i32
    %4 = tpu.memref_slice %arg2[%2, %c0_i32_0] : memref<38x64xf32, #tpu.memory_space<any>> -> memref<11x64xf32, #tpu.memory_space<any>>
    tpu.wait_dma2 semaphore(%arg7 : memref<!tpu.dma_semaphore, #tpu.memory_space<semaphore_mem>>) src(%4 : memref<11x64xf32, #tpu.memory_space<any>>) dst(%arg6 : memref<11x64xf32, #tpu.memory_space<vmem>>)
    %c0 = arith.constant 0 : index
    %c0_1 = arith.constant 0 : index
    %5 = vector.load %arg6[%c0, %c0_1] : memref<11x64xf32, #tpu.memory_space<vmem>>, vector<8x64xf32>
    %6 = arith.truncf %5 : vector<8x64xf32> to vector<8x64xbf16>
    %c0_2 = arith.constant 0 : index
    %c0_3 = arith.constant 0 : index
    %7 = vector.load %arg3[%c0_2, %c0_3] : memref<256x256xbf16, #tpu.memory_space<vmem>>, vector<64x256xbf16>
    %cst = arith.constant dense<0.000000e+00> : vector<8x256xf32>
    %8 = tpu.matmul %6, %7, %cst {dimension_numbers = #tpu.dot_dimension_numbers<[1], [0], [0], [1], [0, 0, 1, 1], [], []>} : vector<8x64xbf16>, vector<64x256xbf16>, vector<8x256xf32> -> vector<8x256xf32>
    %c1 = arith.constant 1 : index
    %c0_4 = arith.constant 0 : index
    %9 = vector.load %arg6[%c1, %c0_4] : memref<11x64xf32, #tpu.memory_space<vmem>>, vector<8x64xf32>
    %10 = arith.truncf %9 : vector<8x64xf32> to vector<8x64xbf16>
    %c64 = arith.constant 64 : index
    %c0_5 = arith.constant 0 : index
    %11 = vector.load %arg3[%c64, %c0_5] : memref<256x256xbf16, #tpu.memory_space<vmem>>, vector<64x256xbf16>
    %cst_6 = arith.constant dense<0.000000e+00> : vector<8x256xf32>
    %12 = tpu.matmul %10, %11, %cst_6 {dimension_numbers = #tpu.dot_dimension_numbers<[1], [0], [0], [1], [0, 0, 1, 1], [], []>} : vector<8x64xbf16>, vector<64x256xbf16>, vector<8x256xf32> -> vector<8x256xf32>
    %13 = arith.addf %8, %12 : vector<8x256xf32>
    %c2 = arith.constant 2 : index
    %c0_7 = arith.constant 0 : index
    %14 = vector.load %arg6[%c2, %c0_7] : memref<11x64xf32, #tpu.memory_space<vmem>>, vector<8x64xf32>
    %15 = arith.truncf %14 : vector<8x64xf32> to vector<8x64xbf16>
    %c128 = arith.constant 128 : index
    %c0_8 = arith.constant 0 : index
    %16 = vector.load %arg3[%c128, %c0_8] : memref<256x256xbf16, #tpu.memory_space<vmem>>, vector<64x256xbf16>
    %cst_9 = arith.constant dense<0.000000e+00> : vector<8x256xf32>
    %17 = tpu.matmul %15, %16, %cst_9 {dimension_numbers = #tpu.dot_dimension_numbers<[1], [0], [0], [1], [0, 0, 1, 1], [], []>} : vector<8x64xbf16>, vector<64x256xbf16>, vector<8x256xf32> -> vector<8x256xf32>
    %18 = arith.addf %13, %17 : vector<8x256xf32>
    %c3 = arith.constant 3 : index
    %c0_10 = arith.constant 0 : index
    %19 = vector.load %arg6[%c3, %c0_10] : memref<11x64xf32, #tpu.memory_space<vmem>>, vector<8x64xf32>
    %20 = arith.truncf %19 : vector<8x64xf32> to vector<8x64xbf16>
    %c192 = arith.constant 192 : index
    %c0_11 = arith.constant 0 : index
    %21 = vector.load %arg3[%c192, %c0_11] : memref<256x256xbf16, #tpu.memory_space<vmem>>, vector<64x256xbf16>
    %cst_12 = arith.constant dense<0.000000e+00> : vector<8x256xf32>
    %22 = tpu.matmul %20, %21, %cst_12 {dimension_numbers = #tpu.dot_dimension_numbers<[1], [0], [0], [1], [0, 0, 1, 1], [], []>} : vector<8x64xbf16>, vector<64x256xbf16>, vector<8x256xf32> -> vector<8x256xf32>
    %23 = arith.addf %18, %22 : vector<8x256xf32>
    %24 = vector.extract_strided_slice %23 {offsets = [0, 0], sizes = [8, 128], strides = [1, 1]} : vector<8x256xf32> to vector<8x128xf32>
    %25 = vector.extract_strided_slice %23 {offsets = [0, 128], sizes = [8, 128], strides = [1, 1]} : vector<8x256xf32> to vector<8x128xf32>
    %26 = arith.mulf %24, %24 : vector<8x128xf32>
    %27 = arith.mulf %25, %25 : vector<8x128xf32>
    %28 = arith.addf %26, %27 : vector<8x128xf32>
    %29 = math.sqrt %28 : vector<8x128xf32>
    %30 = arith.truncf %29 : vector<8x128xf32> to vector<8x128xbf16>
    %c0_13 = arith.constant 0 : index
    %c0_14 = arith.constant 0 : index
    %31 = vector.load %arg4[%c0_13, %c0_14] : memref<128x128xbf16, #tpu.memory_space<vmem>>, vector<128x128xbf16>
    %cst_15 = arith.constant dense<0.000000e+00> : vector<8x128xf32>
    %32 = tpu.matmul %30, %31, %cst_15 {dimension_numbers = #tpu.dot_dimension_numbers<[1], [0], [0], [1], [0, 0, 1, 1], [], []>} : vector<8x128xbf16>, vector<128x128xbf16>, vector<8x128xf32> -> vector<8x128xf32>
    %cst_16 = arith.constant 9.99999974E-6 : f32
    %33 = vector.broadcast %cst_16 : f32 to vector<8x128xf32>
    %34 = arith.maximumf %32, %33 : vector<8x128xf32>
    %35 = math.log %34 : vector<8x128xf32>
    %cst_17 = arith.constant 0.434294492 : f32
    %36 = vector.broadcast %cst_17 : f32 to vector<8x128xf32>
    %37 = arith.mulf %35, %36 : vector<8x128xf32>
    %c0_18 = arith.constant 0 : index
    %c0_19 = arith.constant 0 : index
    %c0_20 = arith.constant 0 : index
    %38 = vector.load %arg5[%c0_18, %c0_19, %c0_20] : memref<1x8x128xf32, #tpu.memory_space<vmem>>, vector<1x8x128xf32>
    %39 = vector.shape_cast %38 : vector<1x8x128xf32> to vector<8x128xf32>
    %40 = vector.shape_cast %37 : vector<8x128xf32> to vector<1x8x128xf32>
    tpu.vector_store %arg5[%c0_18, %c0_19, %c0_20], %40 {strides = array<i32>} : memref<1x8x128xf32, #tpu.memory_space<vmem>>, vector<1x8x128xf32>,
    return
  }
  func.func @transform_1(%arg0: i32, %arg1: i32) -> (i32, i32) {
    %c0_i32 = arith.constant 0 : i32
    %c0_i32_0 = arith.constant 0 : i32
    %c0_i32_1 = arith.constant 0 : i32
    return %c0_i32, %c0_i32_0 : i32, i32
  }
  func.func @transform_2(%arg0: i32, %arg1: i32) -> (i32, i32) {
    %c0_i32 = arith.constant 0 : i32
    %c0_i32_0 = arith.constant 0 : i32
    %c0_i32_1 = arith.constant 0 : i32
    return %c0_i32, %c0_i32_0 : i32, i32
  }
  func.func @transform_3(%arg0: i32, %arg1: i32) -> (i32, i32, i32) {
    %c0_i32 = arith.constant 0 : i32
    %c0_i32_0 = arith.constant 0 : i32
    return %arg0, %arg1, %c0_i32 : i32, i32, i32
  }
}

</mosaic_0001>

<llo_original>
// kernel: tpu_custom_call.1
$region0: #{tpu_custom_call.1}
  #allocation0 [shape = 'u32[]', space=smem, size = 0x4, offset = 0x4, fixed_abs, tag = 'smem constant byte address 0x4 - core index']
  #allocation1 [shape = 'u32[72,128]{1,0:T(1,128)}', space=vmem, size = 0x9000, scoped, tag = 'internal scratch']
  #allocation2 [shape = 'f32[11,64]{1,0:T(8,128)}', space=vmem, size = 0x2000, scoped, tag = 'scratch operand']
  #allocation3 [shape = 's32[1]{0}', space=sflag, size = 0x4, scoped, tag = 'scratch operand']
  #allocation10 [shape = 's32[]', space=sflag, size = 0x4, offset = 0, fixed_abs, tag = 'sflag constant byte address 0x0 - dummy sync flag']
  #allocation11 [shape = 's32[]', space=sflag, size = 0x4, offset = 0, fixed_abs, tag = 'sflag constant byte address 0x0 - dummy sync flag']
  #allocation12 [shape = 'u32[]', space=smem, size = 0x4, offset = 0x44, fixed_abs, tag = 'smem constant byte address 0x44 - assertion arg 0']
  #allocation13 [shape = 'u32[]', space=smem, size = 0x4, offset = 0x48, fixed_abs, tag = 'smem constant byte address 0x48 - assertion arg 1']
  %s0 = inlined_call_operand.hbm [shape: f32[38,64], index: 0, kind: input, shape index: {}]
  %s1 = inlined_call_operand.hbm [shape: bf16[256,256], index: 1, kind: input, shape index: {}]
  %s2 = inlined_call_operand.hbm [shape: bf16[128,128], index: 2, kind: input, shape index: {}]
  %s3 = inlined_call_operand.hbm [shape: f32[2,16,128], index: 3, kind: output, shape index: {}]
  %s4 = sld [smem:[#allocation0]]
  $region53: #{tpu_custom_call.1} parent=0
    _
  %s6 = ssub.s32 1, %s4
  %s7 = scalar_select 0, %s6, %s4
  $region1: #{tpu_custom_call.1} parent=0
    #allocation4 [shape = 'u8[131072]{0}', space=vmem, size = 0x20000, scoped, tag = 'input window, operand 1, single buffered']
    #allocation5 [shape = 's32[2]{0}', space=sflag, size = 0x8, scoped, tag = 'scoped memory for tpu_custom_call.1']
    #allocation6 [shape = 's32[2]{0}', space=sflag, size = 0x8, scoped, tag = 'scoped memory for tpu_custom_call.1']
    #allocation7 [shape = 'u8[32768]{0}', space=vmem, size = 0x8000, scoped, tag = 'input window, operand 2, single buffered']
    #allocation8 [shape = 's32[1]{0}', space=sflag, size = 0x4, scoped, tag = 'scoped memory for tpu_custom_call.1']
    #allocation9 [shape = 'u8[8192]{0}', space=vmem, size = 0x2000, scoped, tag = 'output window, operand 0']
    %8 = vsyncpa [#allocation5], 0
    %9 = vsyncpa [#allocation8], 0
    %10 = vsyncpa [#allocation6], 0
    %s11 = scalar_lea.sflag [#allocation6], 1
    %12 = vsyncpa %s11, 0
    loop: start=0, step=1, limit=6
    $region2: #{tpu_custom_call.1} parent=1 // loop_pre_header
      _
    $region3: #{tpu_custom_call.1} parent=1 // loop_header
      %s14 = sphi 0, %s18
      %p15 = scmp.ge.s32.totalorder %s14, 6
      %s21 = sphi 0, %s33
      %s22 = sphi 0, %s29
      %s23 = sphi 0, %s21
      %s24 = sphi 0, %s22
      %s25 = sphi 0, %s23
      %s26 = sphi 0, %s24
      %s34 = sphi 0, %s34
      %s36 = sphi 0, %s34
      %s37 = sphi 0, %s36
      %s51 = sphi 0, %s37
      %s55 = sphi 0, %s55
      %s57 = sphi 0, %s55
      %s58 = sphi 0, %s57
      %s72 = sphi 0, %s58
      %s80 = sphi 0, %s82
      %s83 = sphi 0, %s80
      %s84 = sphi 0, %s83
      %s100 = sphi 0, %s84
    $region4: #{tpu_custom_call.1} parent=1 // loop_header_branch
      %17 = sbr.rel (%p15) target = $region8
    $region5: #{tpu_custom_call.1} parent=1 // loop_body
      %s19 = ssub.s32 %s14, 1
      %s20 = ssub.s32 %s14, 2
      %s27 = sadd.s32 1, %s22
      %p28 = scmp.ge.s32.totalorder %s27, 2
      %s29 = scalar_select %p28, 0, %s27
      %s30 = sadd.s32 1, %s21
      %s31 = scalar_select %p28, %s30, %s21
      %p32 = scmp.ge.s32.totalorder %s31, 2
      %s33 = scalar_select %p32, 0, %s31
      %s35 = sadd.s32 %s34, 1
      %p38 = scmp.eq.s32.totalorder %s14, 3
      %p39 = scmp.ne.s32.totalorder %s34, %s36
      %p40 = scmp.eq.s32.totalorder %s14, 0
      %p41 = por %p39, %p40
      %p42 = scmp.ne.s32.totalorder %s34, %s36
      %p43 = scmp.eq.s32.totalorder %s19, 3
      %p44 = por %p42, %p43
      %p45 = scmp.ne.s32.totalorder %s36, %s37
      %p46 = scmp.eq.s32.totalorder %s19, 0
      %p47 = por %p45, %p46
      %p48 = scmp.ne.s32.totalorder %s36, %s37
      %p49 = scmp.eq.s32.totalorder %s20, 3
      %p50 = por %p48, %p49
      %p52 = scmp.ne.s32.totalorder %s37, %s51
      %p53 = scmp.eq.s32.totalorder %s20, 0
      %p54 = por %p52, %p53
      %s56 = sadd.s32 %s55, 1
      %p59 = scmp.eq.s32.totalorder %s14, 3
      %p60 = scmp.ne.s32.totalorder %s55, %s57
      %p61 = scmp.eq.s32.totalorder %s14, 0
      %p62 = por %p60, %p61
      %p63 = scmp.ne.s32.totalorder %s55, %s57
      %p64 = scmp.eq.s32.totalorder %s19, 3
      %p65 = por %p63, %p64
      %p66 = scmp.ne.s32.totalorder %s57, %s58
      %p67 = scmp.eq.s32.totalorder %s19, 0
      %p68 = por %p66, %p67
      %p69 = scmp.ne.s32.totalorder %s57, %s58
      %p70 = scmp.eq.s32.totalorder %s20, 3
      %p71 = por %p69, %p70
      %p73 = scmp.ne.s32.totalorder %s58, %s72
      %p74 = scmp.eq.s32.totalorder %s20, 0
      %p75 = por %p73, %p74
      %s76 = ssub.s32 %s21, %s33
      %s77 = ssub.s32 %s22, %s29
      %s78 = sor.u32 %s76, %s77
      %p79 = scmp.eq.s32.totalorder %s78, 0
      %s81 = sadd.s32 %s80, 1
      %s82 = scalar_select %p79, %s80, %s81
      %p85 = pneg %p79
      %p86 = scmp.eq.s32.totalorder %s14, 3
      %p87 = por %p85, %p86
      %p88 = scmp.ne.s32.totalorder %s80, %s83
      %p89 = scmp.eq.s32.totalorder %s14, 0
      %p90 = por %p88, %p89
      %p91 = scmp.ne.s32.totalorder %s80, %s83
      %p92 = scmp.eq.s32.totalorder %s19, 3
      %p93 = por %p91, %p92
      %p94 = scmp.ne.s32.totalorder %s83, %s84
      %p95 = scmp.eq.s32.totalorder %s19, 0
      %p96 = por %p94, %p95
      %p97 = scmp.ne.s32.totalorder %s83, %s84
      %p98 = scmp.eq.s32.totalorder %s20, 3
      %p99 = por %p97, %p98
      %p101 = scmp.ne.s32.totalorder %s84, %s100
      %p102 = scmp.eq.s32.totalorder %s20, 0
      %p103 = por %p101, %p102
      %p104 = scmp.le.s32.totalorder 1, %s14
      %p105 = scmp.lt.s32.totalorder %s14, 5
      %p106 = pnand %p104, %p105
      %p107 = pneg %p106
      // Predicated region
      $region9: #{tpu_custom_call.1} parent=5 // pred_check
        _
      $region10: #{tpu_custom_call.1} parent=5 // pred_check_branch
        %109 = sbr.rel (%p106) target = $region12
      $region11: #{tpu_custom_call.1} parent=5 // pred_region
        %s110 = ssub.s32 %s14, 1
        // Predicated region
        $region13: #{tpu_custom_call.1} parent=11 // pred_check
          %p111 = pneg %p47
        $region14: #{tpu_custom_call.1} parent=11 // pred_check_branch
          %113 = sbr.rel (%p111) target = $region16
        $region15: #{tpu_custom_call.1} parent=11 // pred_region
          %115 = vsyncadd [#allocation5], 0
          %s116 = sshll.u32 %s1, 4
          %s117 = int_to_ptr.hbm [resolvable:$true] %s116
          %s118 = sshll.u32 [#allocation4], 4
          %s119 = int_to_ptr.vmem [resolvable:$true] %s118
          %124 = dma.hbm_to_vmem [thread:$0]  %s117, 4096, %s119, [#allocation5], 128, 128, 8
        $region16: #{tpu_custom_call.1} parent=11 // pred_fallthru
          _
        // Predicated region
        $region17: #{tpu_custom_call.1} parent=11 // pred_check
          %p125 = pneg %p68
        $region18: #{tpu_custom_call.1} parent=11 // pred_check_branch
          %127 = sbr.rel (%p125) target = $region20
        $region19: #{tpu_custom_call.1} parent=11 // pred_region
          %129 = vsyncadd [#allocation8], 0
          %s130 = sshll.u32 %s2, 4
          %s131 = int_to_ptr.hbm [resolvable:$true] %s130
          %s132 = sshll.u32 [#allocation7], 4
          %s133 = int_to_ptr.vmem [resolvable:$true] %s132
          %138 = dma.hbm_to_vmem [thread:$0]  %s131, 1024, %s133, [#allocation8], 64, 64, 4
        $region20: #{tpu_custom_call.1} parent=11 // pred_fallthru
          _
      $region12: #{tpu_custom_call.1} parent=5 // pred_fallthru
        _
      %p139 = scmp.lt.s32.totalorder %s14, 4
      // Predicated region
      $region21: #{tpu_custom_call.1} parent=5 // pred_check
        %p140 = pneg %p139
      $region22: #{tpu_custom_call.1} parent=5 // pred_check_branch
        %142 = sbr.rel (%p140) target = $region24
      $region23: #{tpu_custom_call.1} parent=5 // pred_region
        _
      $region24: #{tpu_custom_call.1} parent=5 // pred_fallthru
        _
      %p143 = scmp.le.s32.totalorder 1, %s14
      %p144 = scmp.lt.s32.totalorder %s14, 5
      %p145 = pnand %p143, %p144
      %p146 = pneg %p145
      // Predicated region
      $region25: #{tpu_custom_call.1} parent=5 // pred_check
        _
      $region26: #{tpu_custom_call.1} parent=5 // pred_check_branch
        %148 = sbr.rel (%p145) target = $region28
      $region27: #{tpu_custom_call.1} parent=5 // pred_region
        %s149 = ssub.s32 %s14, 1
        // Predicated region
        $region29: #{tpu_custom_call.1} parent=27 // pred_check
          %p150 = pneg %p47
        $region30: #{tpu_custom_call.1} parent=27 // pred_check_branch
          %152 = sbr.rel (%p150) target = $region32
        $region31: #{tpu_custom_call.1} parent=27 // pred_region
          %154 = dma.done [#allocation5], 4096
        $region32: #{tpu_custom_call.1} parent=27 // pred_fallthru
          _
        // Predicated region
        $region33: #{tpu_custom_call.1} parent=27 // pred_check
          %p155 = pneg %p68
        $region34: #{tpu_custom_call.1} parent=27 // pred_check_branch
          %157 = sbr.rel (%p155) target = $region36
        $region35: #{tpu_custom_call.1} parent=27 // pred_region
          %159 = dma.done [#allocation8], 1024
        $region36: #{tpu_custom_call.1} parent=27 // pred_fallthru
          _
        %p160 = pneg %p47
        %p161 = pneg %p44
        %p162 = pneg %p68
        %p163 = pneg %p65
        %p164 = pneg %p96
        %p165 = pneg %p93
        %s166 = sand.u32 %s83, 1
        %s167 = scalar_lea.sflag [#allocation6], %s166
        %s168 = sand.u32 %s83, 1
        %s169 = smul.addr %s168, 8
        %s170 = scalar_lea.vmem [#allocation9], %s169
        %s172 = smul.u32 %s23, 19
        %s173 = smul.u32 %s24, 8
        %s174 = sadd.s32 %s172, %s173
        %s175 = scalar_lea.hbm %s0, %s174
        // Predicated region
        $region37: #{tpu_custom_call.1} parent=27 // pred_check
          _
        $region38: #{tpu_custom_call.1} parent=27 // pred_check_branch
          %177 = sbr.rel target = $region40
        $region39: #{tpu_custom_call.1} parent=27 // pred_region
          %178 = sst [smem:[#allocation12]] [#allocation11]
          %179 = sst [smem:[#allocation13]] [#allocation10]
        $region40: #{tpu_custom_call.1} parent=27 // pred_fallthru
          _
        %181 = shalt.err (0)
        %s183 = sshll.u32 %s175, 4
        %s184 = int_to_ptr.hbm [resolvable:$true] %s183
        %s185 = sshll.u32 [#allocation2], 4
        %s186 = int_to_ptr.vmem [resolvable:$true] %s185
        %188 = dma.hbm_to_vmem [thread:$0]  %s184, 176, %s186, [#allocation3]
        %s189 = smul.u32 11, 1
        %s190 = sshll.u32 %s189, 4
        %191 = dma.done [#allocation3], %s190
        %v192 = vld [vmem:[#allocation2] sm:$0xff]
        %v193 = vpack.c.bf16 %v192, %v192
        %v194 = vld [vmem:[#allocation4] sm:$0xff]
        %v195 = vld [vmem:[#allocation4 + $0x8] sm:$0xff]
        %v196 = vld [vmem:[#allocation4 + $0x10] sm:$0xff]
        %v197 = vld [vmem:[#allocation4 + $0x18] sm:$0xff]
        %v198 = vld [vmem:[#allocation4 + $0x20] sm:$0xff]
        %v199 = vld [vmem:[#allocation4 + $0x28] sm:$0xff]
        %v200 = vld [vmem:[#allocation4 + $0x30] sm:$0xff]
        %v201 = vld [vmem:[#allocation4 + $0x38] sm:$0xff]
        %v202 = vld [vmem:[#allocation2 + $0x1] sm:$0xff]
        %v203 = vpack.c.bf16 %v202, %v202
        %v204 = vld [vmem:[#allocation4 + $0x40] sm:$0xff]
        %v205 = vld [vmem:[#allocation4 + $0x48] sm:$0xff]
        %v206 = vld [vmem:[#allocation4 + $0x50] sm:$0xff]
        %v207 = vld [vmem:[#allocation4 + $0x58] sm:$0xff]
        %v208 = vld [vmem:[#allocation4 + $0x60] sm:$0xff]
        %v209 = vld [vmem:[#allocation4 + $0x68] sm:$0xff]
        %v210 = vld [vmem:[#allocation4 + $0x70] sm:$0xff]
        %v211 = vld [vmem:[#allocation4 + $0x78] sm:$0xff]
        %v220 = vunpack.c.l.b16 %v204
        %v221 = vunpack.c.h.b16 %v204
        %v222 = vunpack.c.l.b16 %v205
        %v223 = vunpack.c.h.b16 %v205
        %v224 = vunpack.c.l.b16 %v206
        %v225 = vunpack.c.h.b16 %v206
        %v226 = vunpack.c.l.b16 %v207
        %v227 = vunpack.c.h.b16 %v207
        %v228 = vunpack.c.l.b16 %v208
        %v229 = vunpack.c.h.b16 %v208
        %v230 = vunpack.c.l.b16 %v209
        %v231 = vunpack.c.h.b16 %v209
        %v232 = vunpack.c.l.b16 %v210
        %v233 = vunpack.c.h.b16 %v210
        %v234 = vunpack.c.l.b16 %v211
        %v235 = vunpack.c.h.b16 %v211
        %v236 = vpack.c.b16 %v222, %v220
        %v237 = vpack.c.b16 %v223, %v221
        %v238 = vpack.c.b16 %v226, %v224
        %v239 = vpack.c.b16 %v227, %v225
        %v240 = vpack.c.b16 %v230, %v228
        %v241 = vpack.c.b16 %v231, %v229
        %v242 = vpack.c.b16 %v234, %v232
        %v243 = vpack.c.b16 %v235, %v233
        %vm252 = vcmask 523264
        %v254 = vsel %vm252, %v203, 0
        %256 = vmatpush.bf16.msra.mxu0 0
        %257 = vmatpush.bf16.msra.mxu0 0
        %258 = vmatpush.bf16.msra.mxu0 0
        %259 = vmatpush.bf16.msra.mxu0 0
        %260 = vmatpush.bf16.msra.mxu0 %v242
        %261 = vmatpush.bf16.msra.mxu0 %v240
        %262 = vmatpush.bf16.msra.mxu0 %v238
        %263 = vmatpush.bf16.msra.mxu0 %v236
        %264 = vmatmul.bf16.gmra.mxu0 %v254
        %v265 = vpop.f32.mrf.mxu0
        %v266 = vadd.f32 0.0, %v265
        %v267 = vpop.f32.mrf.mxu0
        %268 = vdwg.mxu0
        %269 = vmatpush.bf16.msra.mxu0 0
        %270 = vmatpush.bf16.msra.mxu0 0
        %271 = vmatpush.bf16.msra.mxu0 0
        %272 = vmatpush.bf16.msra.mxu0 0
        %273 = vmatpush.bf16.msra.mxu0 %v243
        %274 = vmatpush.bf16.msra.mxu0 %v241
        %275 = vmatpush.bf16.msra.mxu0 %v239
        %276 = vmatpush.bf16.msra.mxu0 %v237
        %277 = vmatmul.bf16.gmra.mxu0 %v254
        %v278 = vpop.f32.mrf.mxu0
        %v279 = vadd.f32 0.0, %v278
        %v280 = vpop.f32.mrf.mxu0
        %281 = vdwg.mxu0
        %v290 = vunpack.c.l.b16 %v194
        %v291 = vunpack.c.h.b16 %v194
        %v292 = vunpack.c.l.b16 %v195
        %v293 = vunpack.c.h.b16 %v195
        %v294 = vunpack.c.l.b16 %v196
        %v295 = vunpack.c.h.b16 %v196
        %v296 = vunpack.c.l.b16 %v197
        %v297 = vunpack.c.h.b16 %v197
        %v298 = vunpack.c.l.b16 %v198
        %v299 = vunpack.c.h.b16 %v198
        %v300 = vunpack.c.l.b16 %v199
        %v301 = vunpack.c.h.b16 %v199
        %v302 = vunpack.c.l.b16 %v200
        %v303 = vunpack.c.h.b16 %v200
        %v304 = vunpack.c.l.b16 %v201
        %v305 = vunpack.c.h.b16 %v201
        %v306 = vpack.c.b16 %v292, %v290
        %v307 = vpack.c.b16 %v293, %v291
        %v308 = vpack.c.b16 %v296, %v294
        %v309 = vpack.c.b16 %v297, %v295
        %v310 = vpack.c.b16 %v300, %v298
        %v311 = vpack.c.b16 %v301, %v299
        %v312 = vpack.c.b16 %v304, %v302
        %v313 = vpack.c.b16 %v305, %v303
        %v323 = vsel %vm252, %v193, 0
        %325 = vmatpush.bf16.msra.mxu0 0
        %326 = vmatpush.bf16.msra.mxu0 0
        %327 = vmatpush.bf16.msra.mxu0 0
        %328 = vmatpush.bf16.msra.mxu0 0
        %329 = vmatpush.bf16.msra.mxu0 %v312
        %330 = vmatpush.bf16.msra.mxu0 %v310
        %331 = vmatpush.bf16.msra.mxu0 %v308
        %332 = vmatpush.bf16.msra.mxu0 %v306
        %333 = vmatmul.bf16.gmra.mxu0 %v323
        %v334 = vpop.f32.mrf.mxu0
        %v335 = vadd.f32 %v266, %v334
        %v336 = vpop.f32.mrf.mxu0
        %337 = vdwg.mxu0
        %338 = vmatpush.bf16.msra.mxu0 0
        %339 = vmatpush.bf16.msra.mxu0 0
        %340 = vmatpush.bf16.msra.mxu0 0
        %341 = vmatpush.bf16.msra.mxu0 0
        %342 = vmatpush.bf16.msra.mxu0 %v313
        %343 = vmatpush.bf16.msra.mxu0 %v311
        %344 = vmatpush.bf16.msra.mxu0 %v309
        %345 = vmatpush.bf16.msra.mxu0 %v307
        %346 = vmatmul.bf16.gmra.mxu0 %v323
        %v347 = vpop.f32.mrf.mxu0
        %v348 = vadd.f32 %v279, %v347
        %v349 = vpop.f32.mrf.mxu0
        %350 = vdwg.mxu0
        %v351 = vld [vmem:[#allocation2 + $0x2] sm:$0xff]
        %v352 = vpack.c.bf16 %v351, %v351
        %v353 = vld [vmem:[#allocation4 + $0x80] sm:$0xff]
        %v354 = vld [vmem:[#allocation4 + $0x88] sm:$0xff]
        %v355 = vld [vmem:[#allocation4 + $0x90] sm:$0xff]
        %v356 = vld [vmem:[#allocation4 + $0x98] sm:$0xff]
        %v357 = vld [vmem:[#allocation4 + $0xa0] sm:$0xff]
        %v358 = vld [vmem:[#allocation4 + $0xa8] sm:$0xff]
        %v359 = vld [vmem:[#allocation4 + $0xb0] sm:$0xff]
        %v360 = vld [vmem:[#allocation4 + $0xb8] sm:$0xff]
        %v369 = vunpack.c.l.b16 %v353
        %v370 = vunpack.c.h.b16 %v353
        %v371 = vunpack.c.l.b16 %v354
        %v372 = vunpack.c.h.b16 %v354
        %v373 = vunpack.c.l.b16 %v355
        %v374 = vunpack.c.h.b16 %v355
        %v375 = vunpack.c.l.b16 %v356
        %v376 = vunpack.c.h.b16 %v356
        %v377 = vunpack.c.l.b16 %v357
        %v378 = vunpack.c.h.b16 %v357
        %v379 = vunpack.c.l.b16 %v358
        %v380 = vunpack.c.h.b16 %v358
        %v381 = vunpack.c.l.b16 %v359
        %v382 = vunpack.c.h.b16 %v359
        %v383 = vunpack.c.l.b16 %v360
        %v384 = vunpack.c.h.b16 %v360
        %v385 = vpack.c.b16 %v371, %v369
        %v386 = vpack.c.b16 %v372, %v370
        %v387 = vpack.c.b16 %v375, %v373
        %v388 = vpack.c.b16 %v376, %v374
        %v389 = vpack.c.b16 %v379, %v377
        %v390 = vpack.c.b16 %v380, %v378
        %v391 = vpack.c.b16 %v383, %v381
        %v392 = vpack.c.b16 %v384, %v382
        %v402 = vsel %vm252, %v352, 0
        %404 = vmatpush.bf16.msra.mxu0 0
        %405 = vmatpush.bf16.msra.mxu0 0
        %406 = vmatpush.bf16.msra.mxu0 0
        %407 = vmatpush.bf16.msra.mxu0 0
        %408 = vmatpush.bf16.msra.mxu0 %v391
        %409 = vmatpush.bf16.msra.mxu0 %v389
        %410 = vmatpush.bf16.msra.mxu0 %v387
        %411 = vmatpush.bf16.msra.mxu0 %v385
        %412 = vmatmul.bf16.gmra.mxu0 %v402
        %v413 = vpop.f32.mrf.mxu0
        %v414 = vadd.f32 0.0, %v413
        %v415 = vpop.f32.mrf.mxu0
        %416 = vdwg.mxu0
        %417 = vmatpush.bf16.msra.mxu0 0
        %418 = vmatpush.bf16.msra.mxu0 0
        %419 = vmatpush.bf16.msra.mxu0 0
        %420 = vmatpush.bf16.msra.mxu0 0
        %421 = vmatpush.bf16.msra.mxu0 %v392
        %422 = vmatpush.bf16.msra.mxu0 %v390
        %423 = vmatpush.bf16.msra.mxu0 %v388
        %424 = vmatpush.bf16.msra.mxu0 %v386
        %425 = vmatmul.bf16.gmra.mxu0 %v402
        %v426 = vpop.f32.mrf.mxu0
        %v427 = vadd.f32 0.0, %v426
        %v428 = vpop.f32.mrf.mxu0
        %429 = vdwg.mxu0
        %v430 = vadd.f32 %v335, %v414
        %v431 = vadd.f32 %v348, %v427
        %v432 = vld [vmem:[#allocation2 + $0x3] sm:$0xff]
        %v433 = vpack.c.bf16 %v432, %v432
        %v434 = vld [vmem:[#allocation4 + $0xc0] sm:$0xff]
        %v435 = vld [vmem:[#allocation4 + $0xc8] sm:$0xff]
        %v436 = vld [vmem:[#allocation4 + $0xd0] sm:$0xff]
        %v437 = vld [vmem:[#allocation4 + $0xd8] sm:$0xff]
        %v438 = vld [vmem:[#allocation4 + $0xe0] sm:$0xff]
        %v439 = vld [vmem:[#allocation4 + $0xe8] sm:$0xff]
        %v440 = vld [vmem:[#allocation4 + $0xf0] sm:$0xff]
        %v441 = vld [vmem:[#allocation4 + $0xf8] sm:$0xff]
        %v450 = vunpack.c.l.b16 %v434
        %v451 = vunpack.c.h.b16 %v434
        %v452 = vunpack.c.l.b16 %v435
        %v453 = vunpack.c.h.b16 %v435
        %v454 = vunpack.c.l.b16 %v436
        %v455 = vunpack.c.h.b16 %v436
        %v456 = vunpack.c.l.b16 %v437
        %v457 = vunpack.c.h.b16 %v437
        %v458 = vunpack.c.l.b16 %v438
        %v459 = vunpack.c.h.b16 %v438
        %v460 = vunpack.c.l.b16 %v439
        %v461 = vunpack.c.h.b16 %v439
        %v462 = vunpack.c.l.b16 %v440
        %v463 = vunpack.c.h.b16 %v440
        %v464 = vunpack.c.l.b16 %v441
        %v465 = vunpack.c.h.b16 %v441
        %v466 = vpack.c.b16 %v452, %v450
        %v467 = vpack.c.b16 %v453, %v451
        %v468 = vpack.c.b16 %v456, %v454
        %v469 = vpack.c.b16 %v457, %v455
        %v470 = vpack.c.b16 %v460, %v458
        %v471 = vpack.c.b16 %v461, %v459
        %v472 = vpack.c.b16 %v464, %v462
        %v473 = vpack.c.b16 %v465, %v463
        %v483 = vsel %vm252, %v433, 0
        %485 = vmatpush.bf16.msra.mxu0 0
        %486 = vmatpush.bf16.msra.mxu0 0
        %487 = vmatpush.bf16.msra.mxu0 0
        %488 = vmatpush.bf16.msra.mxu0 0
        %489 = vmatpush.bf16.msra.mxu0 %v472
        %490 = vmatpush.bf16.msra.mxu0 %v470
        %491 = vmatpush.bf16.msra.mxu0 %v468
        %492 = vmatpush.bf16.msra.mxu0 %v466
        %493 = vmatmul.bf16.gmra.mxu0 %v483
        %v494 = vpop.f32.mrf.mxu0
        %v495 = vadd.f32 0.0, %v494
        %v496 = vpop.f32.mrf.mxu0
        %497 = vdwg.mxu0
        %498 = vmatpush.bf16.msra.mxu0 0
        %499 = vmatpush.bf16.msra.mxu0 0
        %500 = vmatpush.bf16.msra.mxu0 0
        %501 = vmatpush.bf16.msra.mxu0 0
        %502 = vmatpush.bf16.msra.mxu0 %v473
        %503 = vmatpush.bf16.msra.mxu0 %v471
        %504 = vmatpush.bf16.msra.mxu0 %v469
        %505 = vmatpush.bf16.msra.mxu0 %v467
        %506 = vmatmul.bf16.gmra.mxu0 %v483
        %v507 = vpop.f32.mrf.mxu0
        %v508 = vadd.f32 0.0, %v507
        %v509 = vpop.f32.mrf.mxu0
        %510 = vdwg.mxu0
        %v511 = vadd.f32 %v430, %v495
        %v512 = vadd.f32 %v431, %v508
        %v513 = vmul.f32 %v511, %v511
        %v514 = vmul.f32 %v512, %v512
        %v515 = vadd.f32 %v513, %v514
        %v516 = vrsqrt.pop %v515
        %v517 = vmul.f32 %v516, %v515
        %v518 = vmul.f32 %v517, %v516
        %v519 = vmul.f32 0.5, %v518
        %v520 = vsub.f32 1.5, %v519
        %v521 = vmul.f32 %v516, %v520
        %v522 = vmul.f32 %v515, %v521
        %vm523 = vcmp.eq.f32.partialorder %v515, inf
        %v524 = vsel %vm523, %v515, %v522
        %vm525 = vcmp.eq.f32.partialorder %v515, 0.0
        %v526 = vand.u32 %v515, 2147483648
        %v527 = vsel %vm525, %v526, %v524
        %v528 = vpack.c.bf16 %v527, %v527
        %v529 = vld [vmem:[#allocation7] sm:$0xf]
        %v530 = vld [vmem:[#allocation7 + $0x4] sm:$0xf]
        %v531 = vld [vmem:[#allocation7 + $0x8] sm:$0xf]
        %v532 = vld [vmem:[#allocation7 + $0xc] sm:$0xf]
        %v533 = vld [vmem:[#allocation7 + $0x10] sm:$0xf]
        %v534 = vld [vmem:[#allocation7 + $0x14] sm:$0xf]
        %v535 = vld [vmem:[#allocation7 + $0x18] sm:$0xf]
        %v536 = vld [vmem:[#allocation7 + $0x1c] sm:$0xf]
        %v537 = vld [vmem:[#allocation7 + $0x20] sm:$0xf]
        %v538 = vld [vmem:[#allocation7 + $0x24] sm:$0xf]
        %v539 = vld [vmem:[#allocation7 + $0x28] sm:$0xf]
        %v540 = vld [vmem:[#allocation7 + $0x2c] sm:$0xf]
        %v541 = vld [vmem:[#allocation7 + $0x30] sm:$0xf]
        %v542 = vld [vmem:[#allocation7 + $0x34] sm:$0xf]
        %v543 = vld [vmem:[#allocation7 + $0x38] sm:$0xf]
        %v544 = vld [vmem:[#allocation7 + $0x3c] sm:$0xf]
        %v561 = vunpack.c.l.b16 %v529
        %v562 = vunpack.c.l.b16 %v530
        %v563 = vunpack.c.l.b16 %v531
        %v564 = vunpack.c.l.b16 %v532
        %v565 = vunpack.c.l.b16 %v533
        %v566 = vunpack.c.l.b16 %v534
        %v567 = vunpack.c.l.b16 %v535
        %v568 = vunpack.c.l.b16 %v536
        %v569 = vunpack.c.l.b16 %v537
        %v570 = vunpack.c.l.b16 %v538
        %v571 = vunpack.c.l.b16 %v539
        %v572 = vunpack.c.l.b16 %v540
        %v573 = vunpack.c.l.b16 %v541
        %v574 = vunpack.c.l.b16 %v542
        %v575 = vunpack.c.l.b16 %v543
        %v576 = vunpack.c.l.b16 %v544
        %v577 = vpack.c.b16 %v562, %v561
        %v578 = vpack.c.b16 %v564, %v563
        %v579 = vpack.c.b16 %v566, %v565
        %v580 = vpack.c.b16 %v568, %v567
        %v581 = vpack.c.b16 %v570, %v569
        %v582 = vpack.c.b16 %v572, %v571
        %v583 = vpack.c.b16 %v574, %v573
        %v584 = vpack.c.b16 %v576, %v575
        %593 = vmatpush.bf16.msra.mxu0 %v584
        %594 = vmatpush.bf16.msra.mxu0 %v583
        %595 = vmatpush.bf16.msra.mxu0 %v582
        %596 = vmatpush.bf16.msra.mxu0 %v581
        %597 = vmatpush.bf16.msra.mxu0 %v580
        %598 = vmatpush.bf16.msra.mxu0 %v579
        %599 = vmatpush.bf16.msra.mxu0 %v578
        %600 = vmatpush.bf16.msra.mxu0 %v577
        %601 = vmatmul.bf16.gmra.mxu0 %v528
        %v602 = vpop.f32.mrf.mxu0
        %v603 = vadd.f32 0.0, %v602
        %v604 = vpop.f32.mrf.mxu0
        %605 = vdwg.mxu0
        %v606 = vmax.f32 %v603, 1e-05
        %v607 = vlog2.pop %v606
        %v608 = vmul.f32 %v607, 0.6931472
        %v609 = vmul.f32 %v608, 0.4342945
        %610 = vst [vmem:[%s170] sm:$0xff] %v609
        %s611 = sand.u32 %s83, 1
        %s612 = scalar_lea.sflag [#allocation6], %s611
        %s613 = sand.u32 %s83, 1
        %s614 = smul.addr %s613, 8
        %s615 = scalar_lea.vmem [#allocation9], %s614
        // Predicated region
        $region41: #{tpu_custom_call.1} parent=27 // pred_check
          %p616 = pneg %p93
        $region42: #{tpu_custom_call.1} parent=27 // pred_check_branch
          %618 = sbr.rel (%p616) target = $region44
        $region43: #{tpu_custom_call.1} parent=27 // pred_region
          %620 = vsyncadd %s612, 0
          %s621 = smul.addr %s23, 2
          %s622 = sadd.s32 %s24, %s621
          %s623 = smul.addr %s622, 8
          %s624 = scalar_lea.hbm %s3, %s623
          %s626 = sshll.u32 %s615, 4
          %s627 = int_to_ptr.vmem [resolvable:$true] %s626
          %s628 = sshll.u32 %s624, 4
          %s629 = int_to_ptr.hbm [resolvable:$true] %s628
          %631 = dma.vmem_to_hbm [thread:$0]  %s627, 128, %s629, %s612
        $region44: #{tpu_custom_call.1} parent=27 // pred_fallthru
          _
      $region28: #{tpu_custom_call.1} parent=5 // pred_fallthru
        _
      %p632 = scmp.le.s32.totalorder 2, %s14
      // Predicated region
      $region45: #{tpu_custom_call.1} parent=5 // pred_check
        %p633 = pneg %p632
      $region46: #{tpu_custom_call.1} parent=5 // pred_check_branch
        %635 = sbr.rel (%p633) target = $region48
      $region47: #{tpu_custom_call.1} parent=5 // pred_region
        %s636 = ssub.s32 %s14, 2
        // Predicated region
        $region49: #{tpu_custom_call.1} parent=47 // pred_check
          %p637 = pneg %p99
        $region50: #{tpu_custom_call.1} parent=47 // pred_check_branch
          %639 = sbr.rel (%p637) target = $region52
        $region51: #{tpu_custom_call.1} parent=47 // pred_region
          %s640 = sand.u32 %s84, 1
          %s641 = scalar_lea.sflag [#allocation6], %s640
          %s642 = sand.u32 %s84, 1
          %s643 = smul.addr %s642, 8
          %s644 = scalar_lea.vmem [#allocation9], %s643
          %646 = dma.done %s641, 128
        $region52: #{tpu_custom_call.1} parent=47 // pred_fallthru
          _
      $region48: #{tpu_custom_call.1} parent=5 // pred_fallthru
        _
    $region6: #{tpu_custom_call.1} parent=1 // loop_footer
      %s18 = sadd.s32 1, %s14
    $region7: #{tpu_custom_call.1} parent=1 // loop_footer_branch
      %13 = sbr.rel target = $region3
    $region8: #{tpu_custom_call.1} parent=1 // loop_exit
      _
    %647 = vsyncpa [#allocation5], 1
    %s648 = scalar_lea.sflag [#allocation5], 1
    %649 = vsyncpa %s648, 1
    %650 = vsyncpa [#allocation8], 1
    %651 = vsyncpa [#allocation6], 1
    %s652 = scalar_lea.sflag [#allocation6], 1
    %653 = vsyncpa %s652, 1
  %654 = vsyncmov [#allocation3]
  %s655 = vpop.sfrf %654
  %p656 = scmp.eq.s32.totalorder %s655, 0
  %p657 = pneg %p656
  %659 = shalt.err (%p657)

</llo_original>
